<compile_context>
chip_gen: v6e
topology: v6e:2x2x1
jax: 0.10.0
libtpu: 0.0.40
codegen_flags: <defaults>
</compile_context>

<pallas_src>
import jax
import jax.numpy as jnp
from jax.experimental import pallas as pl
from jax.experimental.pallas import tpu as pltpu

# ---------------- static configuration (module hyper-parameters) -------------
BATCH = 2
NUM_NODES = 16
INPUT_DIM = 4
HID_DIM = 4
MAX_DIFFUSION_STEP = 2
NUM_SUPPORTS = 1                       # 'laplacian' filter -> 1 support
OUTPUT_DIM = 8
FEAT = INPUT_DIM + HID_DIM             # self._input_size
NUM_MATRICES = NUM_SUPPORTS * MAX_DIFFUSION_STEP + 1
BN = BATCH * NUM_NODES                 # batch rows stacked along node axis


# ------------------------------- Pallas kernel -------------------------------
def _dgc_kernel(bsup_ref, xin_ref, xst_ref, w_ref, b_ref, out_ref):
    """Whole problem in one grid-less invocation.

    bsup_ref : (S, B*N, B*N)  block-diagonal diffusion supports (dense)
    xin_ref  : (B*N, input_dim)   reshaped inputs
    xst_ref  : (B*N, hid_dim)     reshaped hidden state
    w_ref    : (K, F, O)          projection weight, per-diffusion-term slices
    b_ref    : (1, O)             bias
    out_ref  : (B*N, O)
    """
    # concat(inputs, state) along the feature axis -> (B*N, F); tiny lane concat.
    x0 = jnp.concatenate([xin_ref[...], xst_ref[...]], axis=-1)

    xs = [x0]
    x_km2 = x0                           # mirrors the torch local variable `x0`
    if MAX_DIFFUSION_STEP > 0:
        for s in range(NUM_SUPPORTS):
            sup = bsup_ref[s]            # (B*N, B*N), block-diagonal
            x1 = jnp.dot(sup, x_km2, preferred_element_type=jnp.float32)
            xs.append(x1)
            for _ in range(2, MAX_DIFFUSION_STEP + 1):
                x2 = 2.0 * jnp.dot(sup, x1,
                                   preferred_element_type=jnp.float32) - x_km2
                xs.append(x2)
                x1, x_km2 = x2, x1       # exact torch reassignment semantics

    # Projection without a K-way concat: chained per-term matmul accumulation
    # (adjacent dots with no intervening VPU work -> v7x MRB in-place
    # accumulate; on v5e/v6e a single (32,24)@(24,8) concat-push would save
    # two result pops — noise at this size).
    acc = jnp.dot(xs[0], w_ref[0], preferred_element_type=jnp.float32)
    for k in range(1, NUM_MATRICES):
        acc = acc + jnp.dot(xs[k], w_ref[k],
                            preferred_element_type=jnp.float32)
    out_ref[...] = (acc + b_ref[...]).astype(out_ref.dtype)


# ----------------------- one-time parameter preprocessing --------------------
def init_dgc_params(supports, weight, biases):
    """Hoisted out of the hot path: supports / weights are static across the
    DCRNN recurrence, so compute these once and reuse every timestep.

    supports: (S, N, N) dense; weight: (F*K, O) in torch row order (f*K + k);
    biases: (O,).
    Returns (bsup, w_kfo, b2) ready to feed the kernel directly.
    """
    # Block-diagonal supports (4 KiB): one MXU push diffuses the whole batch.
    # bsup[s, b*N+n, c*N+m] = (b==c) * supports[s, n, m].
    eye_b = jnp.eye(BATCH, dtype=jnp.float32)
    bsup = jnp.einsum('bc,snm->sbncm', eye_b, supports.astype(jnp.float32))
    bsup = bsup.reshape(NUM_SUPPORTS, BN, BN)

    # Permute torch weight rows (f*K + k) -> per-term slices (K, F, O).
    w_kfo = (weight.astype(jnp.float32)
                   .reshape(FEAT, NUM_MATRICES, OUTPUT_DIM)
                   .transpose(1, 0, 2))
    b2 = biases.astype(jnp.float32).reshape(1, OUTPUT_DIM)

    bsup, w_kfo, b2 = jax.device_put((bsup, w_kfo, b2))
    return (jax.block_until_ready(bsup), jax.block_until_ready(w_kfo),
            jax.block_until_ready(b2))


# ------------------------------- hot-path call --------------------------------
@jax.jit
def diffusion_graph_conv(bsup, w_kfo, b2, inputs, state):
    """inputs: (B, N*input_dim); state: (B, N*hid_dim).
    Returns (B, N*output_size), matching the torch module."""
    B = inputs.shape[0]
    # Row-major contiguous reshapes: free (bitcast) under jit.
    x_in = inputs.reshape(B * NUM_NODES, INPUT_DIM).astype(jnp.float32)
    x_st = state.reshape(B * NUM_NODES, HID_DIM).astype(jnp.float32)

    vmem = pl.BlockSpec(memory_space=pltpu.MemorySpace.VMEM)
    out = pl.pallas_call(
        _dgc_kernel,
        out_shape=jax.ShapeDtypeStruct((B * NUM_NODES, OUTPUT_DIM),
                                       jnp.float32),
        in_specs=[vmem, vmem, vmem, vmem, vmem],
        out_specs=vmem,
    )(bsup, x_in, x_st, w_kfo, b2)

    return out.reshape(B, NUM_NODES * OUTPUT_DIM)


# --------------------------- pure-JAX reference ------------------------------
def _reference(supports, inputs, state, weight, biases, output_size):
    B = inputs.shape[0]
    x0 = jnp.concatenate(
        [inputs.reshape(B, NUM_NODES, -1), state.reshape(B, NUM_NODES, -1)],
        axis=2).astype(jnp.float32)
    x = x0[:, None]                                       # (B, 1, N, F)
    xk0 = x0
    if MAX_DIFFUSION_STEP > 0:
        for s in range(NUM_SUPPORTS):
            sup = supports[s]
            x1 = jnp.einsum('nm,bmf->bnf', sup, xk0)
            x = jnp.concatenate([x, x1[:, None]], axis=1)
            for _ in range(2, MAX_DIFFUSION_STEP + 1):
                x2 = 2.0 * jnp.einsum('nm,bmf->bnf', sup, x1) - xk0
                x = jnp.concatenate([x, x2[:, None]], axis=1)
                x1, xk0 = x2, x1
    x = jnp.transpose(x, (0, 2, 3, 1))                    # (B, N, F, K)
    x = x.reshape(B * NUM_NODES, FEAT * NUM_MATRICES)
    y = x @ weight + biases
    return y.reshape(B, NUM_NODES * output_size)


# ----------------------------------- main ------------------------------------
if __name__ == "__main__":
    key = jax.random.PRNGKey(0)
    k_in, k_st, k_sup, k_w = jax.random.split(key, 4)

    # Deterministic synthetic inputs (torch sparse supports -> dense here).
    # TODO(synk): supports are dense in-kernel; torch.sparse SpMM has no
    #             direct Pallas equivalent, dense matmul is numerically equal.
    inputs = jax.random.normal(k_in, (BATCH, NUM_NODES * INPUT_DIM), jnp.float32)
    state = jax.random.normal(k_st, (BATCH, NUM_NODES * HID_DIM), jnp.float32)
    supports = jax.random.normal(k_sup, (NUM_SUPPORTS, NUM_NODES, NUM_NODES),
                                 jnp.float32) / jnp.sqrt(NUM_NODES)

    # Parameters: xavier_normal_(gain=1.414) on (F*K, O), bias = 0.0.
    fan_in, fan_out = FEAT * NUM_MATRICES, OUTPUT_DIM
    std = 1.414 * (2.0 / (fan_in + fan_out)) ** 0.5
    weight = std * jax.random.normal(k_w, (fan_in, fan_out), jnp.float32)
    biases = jnp.zeros((OUTPUT_DIM,), jnp.float32)

    # One-time preprocessing (outside the recurrent hot path).
    bsup, w_kfo, b2 = init_dgc_params(supports, weight, biases)

    out = diffusion_graph_conv(bsup, w_kfo, b2, inputs, state)
    out = jax.block_until_ready(out)

    ref = _reference(supports, inputs, state, weight, biases, OUTPUT_DIM)
    assert out.shape == (BATCH, NUM_NODES * OUTPUT_DIM)
    assert jnp.allclose(out, ref, rtol=1e-4, atol=1e-4)

    print("KERNEL_OK")
</pallas_src>

<mosaic_0001>
module attributes {stable_mosaic.version = 11 : i64} {
  func.func @_dgc_kernel(%arg0: memref<1x32x32xf32, #tpu.memory_space<vmem>>, %arg1: memref<32x4xf32, #tpu.memory_space<vmem>>, %arg2: memref<32x4xf32, #tpu.memory_space<vmem>>, %arg3: memref<3x8x8xf32, #tpu.memory_space<vmem>>, %arg4: memref<1x8xf32, #tpu.memory_space<vmem>>, %arg5: memref<32x8xf32, #tpu.memory_space<vmem>>) attributes {dimension_semantics = [], scalar_prefetch = 0 : i64, scratch_operands = 0 : i64, tpu.core_type = #tpu.core_type<tc>} {
    %c0 = arith.constant 0 : index
    %c0_0 = arith.constant 0 : index
    %0 = vector.load %arg1[%c0, %c0_0] : memref<32x4xf32, #tpu.memory_space<vmem>>, vector<32x4xf32>
    %c0_1 = arith.constant 0 : index
    %c0_2 = arith.constant 0 : index
    %1 = vector.load %arg2[%c0_1, %c0_2] : memref<32x4xf32, #tpu.memory_space<vmem>>, vector<32x4xf32>
    %2 = tpu.concatenate %0, %1 in 1 : vector<32x4xf32>, vector<32x4xf32> -> vector<32x8xf32>
    %c0_3 = arith.constant 0 : index
    %c0_4 = arith.constant 0 : index
    %c0_5 = arith.constant 0 : index
    %3 = vector.load %arg0[%c0_3, %c0_4, %c0_5] : memref<1x32x32xf32, #tpu.memory_space<vmem>>, vector<1x32x32xf32>
    %4 = vector.shape_cast %3 : vector<1x32x32xf32> to vector<32x32xf32>
    %cst = arith.constant dense<0.000000e+00> : vector<32x8xf32>
    %5 = tpu.matmul %4, %2, %cst {dimension_numbers = #tpu.dot_dimension_numbers<[1], [0], [0], [1], [0, 0, 1, 1], [], []>} : vector<32x32xf32>, vector<32x8xf32>, vector<32x8xf32> -> vector<32x8xf32>
    %cst_6 = arith.constant dense<0.000000e+00> : vector<32x8xf32>
    %6 = tpu.matmul %4, %5, %cst_6 {dimension_numbers = #tpu.dot_dimension_numbers<[1], [0], [0], [1], [0, 0, 1, 1], [], []>} : vector<32x32xf32>, vector<32x8xf32>, vector<32x8xf32> -> vector<32x8xf32>
    %cst_7 = arith.constant 2.000000e+00 : f32
    %7 = vector.broadcast %cst_7 : f32 to vector<32x8xf32>
    %8 = arith.mulf %7, %6 : vector<32x8xf32>
    %9 = arith.subf %8, %2 : vector<32x8xf32>
    %c0_8 = arith.constant 0 : index
    %c0_9 = arith.constant 0 : index
    %c0_10 = arith.constant 0 : index
    %10 = vector.load %arg3[%c0_8, %c0_9, %c0_10] : memref<3x8x8xf32, #tpu.memory_space<vmem>>, vector<1x8x8xf32>
    %11 = vector.shape_cast %10 : vector<1x8x8xf32> to vector<8x8xf32>
    %cst_11 = arith.constant dense<0.000000e+00> : vector<32x8xf32>
    %12 = tpu.matmul %2, %11, %cst_11 {dimension_numbers = #tpu.dot_dimension_numbers<[1], [0], [0], [1], [0, 0, 1, 1], [], []>} : vector<32x8xf32>, vector<8x8xf32>, vector<32x8xf32> -> vector<32x8xf32>
    %c1 = arith.constant 1 : index
    %c0_12 = arith.constant 0 : index
    %c0_13 = arith.constant 0 : index
    %13 = vector.load %arg3[%c1, %c0_12, %c0_13] : memref<3x8x8xf32, #tpu.memory_space<vmem>>, vector<1x8x8xf32>
    %14 = vector.shape_cast %13 : vector<1x8x8xf32> to vector<8x8xf32>
    %cst_14 = arith.constant dense<0.000000e+00> : vector<32x8xf32>
    %15 = tpu.matmul %5, %14, %cst_14 {dimension_numbers = #tpu.dot_dimension_numbers<[1], [0], [0], [1], [0, 0, 1, 1], [], []>} : vector<32x8xf32>, vector<8x8xf32>, vector<32x8xf32> -> vector<32x8xf32>
    %16 = arith.addf %12, %15 : vector<32x8xf32>
    %c2 = arith.constant 2 : index
    %c0_15 = arith.constant 0 : index
    %c0_16 = arith.constant 0 : index
    %17 = vector.load %arg3[%c2, %c0_15, %c0_16] : memref<3x8x8xf32, #tpu.memory_space<vmem>>, vector<1x8x8xf32>
    %18 = vector.shape_cast %17 : vector<1x8x8xf32> to vector<8x8xf32>
    %cst_17 = arith.constant dense<0.000000e+00> : vector<32x8xf32>
    %19 = tpu.matmul %9, %18, %cst_17 {dimension_numbers = #tpu.dot_dimension_numbers<[1], [0], [0], [1], [0, 0, 1, 1], [], []>} : vector<32x8xf32>, vector<8x8xf32>, vector<32x8xf32> -> vector<32x8xf32>
    %20 = arith.addf %16, %19 : vector<32x8xf32>
    %c0_18 = arith.constant 0 : index
    %c0_19 = arith.constant 0 : index
    %21 = vector.load %arg4[%c0_18, %c0_19] : memref<1x8xf32, #tpu.memory_space<vmem>>, vector<1x8xf32>
    %22 = vector.broadcast %21 : vector<1x8xf32> to vector<32x8xf32>
    %23 = arith.addf %20, %22 : vector<32x8xf32>
    %c0_20 = arith.constant 0 : index
    %c0_21 = arith.constant 0 : index
    %24 = vector.load %arg5[%c0_20, %c0_21] : memref<32x8xf32, #tpu.memory_space<vmem>>, vector<32x8xf32>
    tpu.vector_store %arg5[%c0_20, %c0_21], %23 {strides = array<i32>} : memref<32x8xf32, #tpu.memory_space<vmem>>, vector<32x8xf32>,
    return
  }
}

</mosaic_0001>

<llo_original>
// kernel: diffusion_graph_conv.1
$region0: #{diffusion_graph_conv.1}
  #allocation0 [shape = 'u32[]', space=smem, size = 0x4, offset = 0x4, fixed_abs, tag = 'smem constant byte address 0x4 - core index']
  #allocation1 [shape = 'u32[144,128]{1,0:T(1,128)}', space=vmem, size = 0x12000, scoped, tag = 'internal scratch']
  %s0 = inlined_call_operand.vmem [shape: f32[1,32,32], index: 0, kind: input, shape index: {}]
  %s1 = inlined_call_operand.vmem [shape: f32[32,4], index: 1, kind: input, shape index: {}]
  %s2 = inlined_call_operand.vmem [shape: f32[32,4], index: 2, kind: input, shape index: {}]
  %s3 = inlined_call_operand.vmem [shape: f32[3,8,8], index: 3, kind: input, shape index: {}]
  %s4 = inlined_call_operand.vmem [shape: f32[1,8], index: 4, kind: input, shape index: {}]
  %s5 = inlined_call_operand.vmem [shape: f32[32,8], index: 5, kind: output, shape index: {}]
  %s6 = sld [smem:[#allocation0]]
  $region30: #{diffusion_graph_conv.1} parent=0
    _
  %s8 = ssub.s32 1, %s6
  %s9 = scalar_select 0, %s8, %s6
  // Predicated region
  $region2: #{diffusion_graph_conv.1} parent=0 // pred_check
    _
  $region3: #{diffusion_graph_conv.1} parent=0 // pred_check_branch
    %11 = sbr.rel (0) target = $region5
  $region4: #{diffusion_graph_conv.1} parent=0 // pred_region
    _
  $region5: #{diffusion_graph_conv.1} parent=0 // pred_fallthru
    _
  // Predicated region
  $region6: #{diffusion_graph_conv.1} parent=0 // pred_check
    _
  $region7: #{diffusion_graph_conv.1} parent=0 // pred_check_branch
    %13 = sbr.rel (0) target = $region9
  $region8: #{diffusion_graph_conv.1} parent=0 // pred_region
    _
  $region9: #{diffusion_graph_conv.1} parent=0 // pred_fallthru
    _
  // Predicated region
  $region10: #{diffusion_graph_conv.1} parent=0 // pred_check
    _
  $region11: #{diffusion_graph_conv.1} parent=0 // pred_check_branch
    %15 = sbr.rel (0) target = $region13
  $region12: #{diffusion_graph_conv.1} parent=0 // pred_region
    _
  $region13: #{diffusion_graph_conv.1} parent=0 // pred_fallthru
    _
  // Predicated region
  $region14: #{diffusion_graph_conv.1} parent=0 // pred_check
    _
  $region15: #{diffusion_graph_conv.1} parent=0 // pred_check_branch
    %17 = sbr.rel (0) target = $region17
  $region16: #{diffusion_graph_conv.1} parent=0 // pred_region
    _
  $region17: #{diffusion_graph_conv.1} parent=0 // pred_fallthru
    _
  // Predicated region
  $region18: #{diffusion_graph_conv.1} parent=0 // pred_check
    _
  $region19: #{diffusion_graph_conv.1} parent=0 // pred_check_branch
    %19 = sbr.rel (0) target = $region21
  $region20: #{diffusion_graph_conv.1} parent=0 // pred_region
    _
  $region21: #{diffusion_graph_conv.1} parent=0 // pred_fallthru
    _
  %v20 = vld [vmem:[%s1] sm:$0xff]
  %v21 = vld [vmem:[%s1 + $0x8] sm:$0xff]
  %v22 = vld [vmem:[%s1 + $0x10] sm:$0xff]
  %v23 = vld [vmem:[%s1 + $0x18] sm:$0xff]
  %v24 = vld [vmem:[%s2] sm:$0xff]
  %v25 = vld [vmem:[%s2 + $0x8] sm:$0xff]
  %v26 = vld [vmem:[%s2 + $0x10] sm:$0xff]
  %v27 = vld [vmem:[%s2 + $0x18] sm:$0xff]
  %32 = vrot.lane.b32.xlu0 %v24, 4
  %v33 = vpop.permute.xlu0 %32
  %34 = vrot.lane.b32.xlu0 %v25, 4
  %v35 = vpop.permute.xlu0 %34
  %36 = vrot.lane.b32.xlu0 %v26, 4
  %v37 = vpop.permute.xlu0 %36
  %38 = vrot.lane.b32.xlu0 %v27, 4
  %v39 = vpop.permute.xlu0 %38
  %vm44 = vcmask 31744
  %v45 = vsel %vm44, %v20, %v33
  %v46 = vsel %vm44, %v21, %v35
  %v47 = vsel %vm44, %v22, %v37
  %v48 = vsel %vm44, %v23, %v39
  %v49 = vld [vmem:[%s0] sm:$0xff]
  %v50 = vld [vmem:[%s0 + $0x8] sm:$0xff]
  %v51 = vld [vmem:[%s0 + $0x10] sm:$0xff]
  %v52 = vld [vmem:[%s0 + $0x18] sm:$0xff]
  %vm53 = vcmask 261120
  %v55 = vsel %vm53, %v49, 0
  %v58 = vsel %vm53, %v50, 0
  %v61 = vsel %vm53, %v51, 0
  %v64 = vsel %vm53, %v52, 0
  %66 = vmatprep.subr.mxu0 0.0
  %67 = vmatpush1.msra.mxu0 0.0
  %68 = vmatprep.subr.mxu0 0.0
  %69 = vmatpush1.msra.mxu0 0.0
  %70 = vmatprep.subr.mxu0 0.0
  %71 = vmatpush1.msra.mxu0 0.0
  %72 = vmatprep.subr.mxu0 0.0
  %73 = vmatpush1.msra.mxu0 0.0
  %74 = vmatprep.subr.mxu0 0.0
  %75 = vmatpush1.msra.mxu0 0.0
  %76 = vmatprep.subr.mxu0 0.0
  %77 = vmatpush1.msra.mxu0 0.0
  %78 = vmatprep.subr.mxu0 0.0
  %79 = vmatpush1.msra.mxu0 0.0
  %80 = vmatprep.subr.mxu0 0.0
  %81 = vmatpush1.msra.mxu0 0.0
  %82 = vmatprep.subr.mxu0 0.0
  %83 = vmatpush1.msra.mxu0 0.0
  %84 = vmatprep.subr.mxu0 0.0
  %85 = vmatpush1.msra.mxu0 0.0
  %86 = vmatprep.subr.mxu0 0.0
  %87 = vmatpush1.msra.mxu0 0.0
  %88 = vmatprep.subr.mxu0 0.0
  %89 = vmatpush1.msra.mxu0 0.0
  %90 = vmatprep.subr.mxu0 0.0
  %91 = vmatpush1.msra.mxu0 %v48
  %92 = vmatprep.subr.mxu0 0.0
  %93 = vmatpush1.msra.mxu0 %v47
  %94 = vmatprep.subr.mxu0 0.0
  %95 = vmatpush1.msra.mxu0 %v46
  %96 = vmatprep.subr.mxu0 0.0
  %97 = vmatpush1.msra.mxu0 %v45
  %98 = vmatprep.subr.mxu0 0.0
  %99 = vmatpush2.msra.mxu0 0.0
  %100 = vmatprep.subr.mxu0 0.0
  %101 = vmatpush2.msra.mxu0 0.0
  %102 = vmatprep.subr.mxu0 0.0
  %103 = vmatpush2.msra.mxu0 0.0
  %104 = vmatprep.subr.mxu0 0.0
  %105 = vmatpush2.msra.mxu0 0.0
  %106 = vmatprep.subr.mxu0 0.0
  %107 = vmatpush2.msra.mxu0 0.0
  %108 = vmatprep.subr.mxu0 0.0
  %109 = vmatpush2.msra.mxu0 0.0
  %110 = vmatprep.subr.mxu0 0.0
  %111 = vmatpush2.msra.mxu0 0.0
  %112 = vmatprep.subr.mxu0 0.0
  %113 = vmatpush2.msra.mxu0 0.0
  %114 = vmatprep.subr.mxu0 0.0
  %115 = vmatpush2.msra.mxu0 0.0
  %116 = vmatprep.subr.mxu0 0.0
  %117 = vmatpush2.msra.mxu0 0.0
  %118 = vmatprep.subr.mxu0 0.0
  %119 = vmatpush2.msra.mxu0 0.0
  %120 = vmatprep.subr.mxu0 0.0
  %121 = vmatpush2.msra.mxu0 0.0
  %122 = vmatprep.subr.mxu0 0.0
  %123 = vmatpush2.msra.mxu0 0.0
  %124 = vmatprep.subr.mxu0 0.0
  %125 = vmatpush2.msra.mxu0 0.0
  %126 = vmatprep.subr.mxu0 0.0
  %127 = vmatpush2.msra.mxu0 0.0
  %128 = vmatprep.subr.mxu0 0.0
  %129 = vmatpush2.msra.mxu0 0.0
  %130 = vmatprep.mubr.f32.mxu0 0.0
  %131 = vmatmul.mubr.f32.gmra.mxu0 %v55
  %v132 = vpop.f32.mrf.mxu0
  %v133 = vadd.f32 0.0, %v132
  %v134 = vpop.f32.mrf.mxu0
  %135 = vmatprep.mubr.f32.mxu0 0.0
  %136 = vmatmul.mubr.f32.gmra.mxu0 %v58
  %v137 = vpop.f32.mrf.mxu0
  %v138 = vadd.f32 0.0, %v137
  %v139 = vpop.f32.mrf.mxu0
  %140 = vmatprep.mubr.f32.mxu0 0.0
  %141 = vmatmul.mubr.f32.gmra.mxu0 %v61
  %v142 = vpop.f32.mrf.mxu0
  %v143 = vadd.f32 0.0, %v142
  %v144 = vpop.f32.mrf.mxu0
  %145 = vmatprep.mubr.f32.mxu0 0.0
  %146 = vmatmul.mubr.f32.gmra.mxu0 %v64
  %v147 = vpop.f32.mrf.mxu0
  %v148 = vadd.f32 0.0, %v147
  %v149 = vpop.f32.mrf.mxu0
  %150 = vdwg.mxu0
  %151 = vmatprep.subr.mxu0 0.0
  %152 = vmatpush1.msra.mxu0 0.0
  %153 = vmatprep.subr.mxu0 0.0
  %154 = vmatpush1.msra.mxu0 0.0
  %155 = vmatprep.subr.mxu0 0.0
  %156 = vmatpush1.msra.mxu0 0.0
  %157 = vmatprep.subr.mxu0 0.0
  %158 = vmatpush1.msra.mxu0 0.0
  %159 = vmatprep.subr.mxu0 0.0
  %160 = vmatpush1.msra.mxu0 0.0
  %161 = vmatprep.subr.mxu0 0.0
  %162 = vmatpush1.msra.mxu0 0.0
  %163 = vmatprep.subr.mxu0 0.0
  %164 = vmatpush1.msra.mxu0 0.0
  %165 = vmatprep.subr.mxu0 0.0
  %166 = vmatpush1.msra.mxu0 0.0
  %167 = vmatprep.subr.mxu0 0.0
  %168 = vmatpush1.msra.mxu0 0.0
  %169 = vmatprep.subr.mxu0 0.0
  %170 = vmatpush1.msra.mxu0 0.0
  %171 = vmatprep.subr.mxu0 0.0
  %172 = vmatpush1.msra.mxu0 0.0
  %173 = vmatprep.subr.mxu0 0.0
  %174 = vmatpush1.msra.mxu0 0.0
  %175 = vmatprep.subr.mxu0 0.0
  %176 = vmatpush1.msra.mxu0 %v148
  %177 = vmatprep.subr.mxu0 0.0
  %178 = vmatpush1.msra.mxu0 %v143
  %179 = vmatprep.subr.mxu0 0.0
  %180 = vmatpush1.msra.mxu0 %v138
  %181 = vmatprep.subr.mxu0 0.0
  %182 = vmatpush1.msra.mxu0 %v133
  %183 = vmatprep.subr.mxu0 0.0
  %184 = vmatpush2.msra.mxu0 0.0
  %185 = vmatprep.subr.mxu0 0.0
  %186 = vmatpush2.msra.mxu0 0.0
  %187 = vmatprep.subr.mxu0 0.0
  %188 = vmatpush2.msra.mxu0 0.0
  %189 = vmatprep.subr.mxu0 0.0
  %190 = vmatpush2.msra.mxu0 0.0
  %191 = vmatprep.subr.mxu0 0.0
  %192 = vmatpush2.msra.mxu0 0.0
  %193 = vmatprep.subr.mxu0 0.0
  %194 = vmatpush2.msra.mxu0 0.0
  %195 = vmatprep.subr.mxu0 0.0
  %196 = vmatpush2.msra.mxu0 0.0
  %197 = vmatprep.subr.mxu0 0.0
  %198 = vmatpush2.msra.mxu0 0.0
  %199 = vmatprep.subr.mxu0 0.0
  %200 = vmatpush2.msra.mxu0 0.0
  %201 = vmatprep.subr.mxu0 0.0
  %202 = vmatpush2.msra.mxu0 0.0
  %203 = vmatprep.subr.mxu0 0.0
  %204 = vmatpush2.msra.mxu0 0.0
  %205 = vmatprep.subr.mxu0 0.0
  %206 = vmatpush2.msra.mxu0 0.0
  %207 = vmatprep.subr.mxu0 0.0
  %208 = vmatpush2.msra.mxu0 0.0
  %209 = vmatprep.subr.mxu0 0.0
  %210 = vmatpush2.msra.mxu0 0.0
  %211 = vmatprep.subr.mxu0 0.0
  %212 = vmatpush2.msra.mxu0 0.0
  %213 = vmatprep.subr.mxu0 0.0
  %214 = vmatpush2.msra.mxu0 0.0
  %215 = vmatprep.mubr.f32.mxu0 0.0
  %216 = vmatmul.mubr.f32.gmra.mxu0 %v55
  %v217 = vpop.f32.mrf.mxu0
  %v218 = vadd.f32 0.0, %v217
  %v219 = vpop.f32.mrf.mxu0
  %220 = vmatprep.mubr.f32.mxu0 0.0
  %221 = vmatmul.mubr.f32.gmra.mxu0 %v58
  %v222 = vpop.f32.mrf.mxu0
  %v223 = vadd.f32 0.0, %v222
  %v224 = vpop.f32.mrf.mxu0
  %225 = vmatprep.mubr.f32.mxu0 0.0
  %226 = vmatmul.mubr.f32.gmra.mxu0 %v61
  %v227 = vpop.f32.mrf.mxu0
  %v228 = vadd.f32 0.0, %v227
  %v229 = vpop.f32.mrf.mxu0
  %230 = vmatprep.mubr.f32.mxu0 0.0
  %231 = vmatmul.mubr.f32.gmra.mxu0 %v64
  %v232 = vpop.f32.mrf.mxu0
  %v233 = vadd.f32 0.0, %v232
  %v234 = vpop.f32.mrf.mxu0
  %235 = vdwg.mxu0
  %v236 = vmul.f32 %v218, 2.0
  %v237 = vmul.f32 %v223, 2.0
  %v238 = vmul.f32 %v228, 2.0
  %v239 = vmul.f32 %v233, 2.0
  %v240 = vsub.f32 %v236, %v45
  %v241 = vsub.f32 %v237, %v46
  %v242 = vsub.f32 %v238, %v47
  %v243 = vsub.f32 %v239, %v48
  %v244 = vld [vmem:[%s3] sm:$0xff]
  %s245 = scalar_lea.vmem %s3, 8
  %v246 = vld [vmem:[%s245] sm:$0xff]
  %vm247 = vcmask 64512
  %v249 = vsel %vm247, %v133, 0
  %v252 = vsel %vm247, %v138, 0
  %v255 = vsel %vm247, %v143, 0
  %v258 = vsel %vm247, %v148, 0
  %260 = vmatprep.subr.mxu0 0.0
  %261 = vmatpush1.msra.mxu0 0.0
  %262 = vmatprep.subr.mxu0 0.0
  %263 = vmatpush1.msra.mxu0 0.0
  %264 = vmatprep.subr.mxu0 0.0
  %265 = vmatpush1.msra.mxu0 0.0
  %266 = vmatprep.subr.mxu0 0.0
  %267 = vmatpush1.msra.mxu0 0.0
  %268 = vmatprep.subr.mxu0 0.0
  %269 = vmatpush1.msra.mxu0 0.0
  %270 = vmatprep.subr.mxu0 0.0
  %271 = vmatpush1.msra.mxu0 0.0
  %272 = vmatprep.subr.mxu0 0.0
  %273 = vmatpush1.msra.mxu0 0.0
  %274 = vmatprep.subr.mxu0 0.0
  %275 = vmatpush1.msra.mxu0 0.0
  %276 = vmatprep.subr.mxu0 0.0
  %277 = vmatpush1.msra.mxu0 0.0
  %278 = vmatprep.subr.mxu0 0.0
  %279 = vmatpush1.msra.mxu0 0.0
  %280 = vmatprep.subr.mxu0 0.0
  %281 = vmatpush1.msra.mxu0 0.0
  %282 = vmatprep.subr.mxu0 0.0
  %283 = vmatpush1.msra.mxu0 0.0
  %284 = vmatprep.subr.mxu0 0.0
  %285 = vmatpush1.msra.mxu0 0.0
  %286 = vmatprep.subr.mxu0 0.0
  %287 = vmatpush1.msra.mxu0 0.0
  %288 = vmatprep.subr.mxu0 0.0
  %289 = vmatpush1.msra.mxu0 0.0
  %290 = vmatprep.subr.mxu0 0.0
  %291 = vmatpush1.msra.mxu0 %v246
  %292 = vmatprep.subr.mxu0 0.0
  %293 = vmatpush2.msra.mxu0 0.0
  %294 = vmatprep.subr.mxu0 0.0
  %295 = vmatpush2.msra.mxu0 0.0
  %296 = vmatprep.subr.mxu0 0.0
  %297 = vmatpush2.msra.mxu0 0.0
  %298 = vmatprep.subr.mxu0 0.0
  %299 = vmatpush2.msra.mxu0 0.0
  %300 = vmatprep.subr.mxu0 0.0
  %301 = vmatpush2.msra.mxu0 0.0
  %302 = vmatprep.subr.mxu0 0.0
  %303 = vmatpush2.msra.mxu0 0.0
  %304 = vmatprep.subr.mxu0 0.0
  %305 = vmatpush2.msra.mxu0 0.0
  %306 = vmatprep.subr.mxu0 0.0
  %307 = vmatpush2.msra.mxu0 0.0
  %308 = vmatprep.subr.mxu0 0.0
  %309 = vmatpush2.msra.mxu0 0.0
  %310 = vmatprep.subr.mxu0 0.0
  %311 = vmatpush2.msra.mxu0 0.0
  %312 = vmatprep.subr.mxu0 0.0
  %313 = vmatpush2.msra.mxu0 0.0
  %314 = vmatprep.subr.mxu0 0.0
  %315 = vmatpush2.msra.mxu0 0.0
  %316 = vmatprep.subr.mxu0 0.0
  %317 = vmatpush2.msra.mxu0 0.0
  %318 = vmatprep.subr.mxu0 0.0
  %319 = vmatpush2.msra.mxu0 0.0
  %320 = vmatprep.subr.mxu0 0.0
  %321 = vmatpush2.msra.mxu0 0.0
  %322 = vmatprep.subr.mxu0 0.0
  %323 = vmatpush2.msra.mxu0 0.0
  %324 = vmatprep.mubr.f32.mxu0 0.0
  %325 = vmatmul.mubr.f32.gmra.mxu0 %v249
  %v326 = vpop.f32.mrf.mxu0
  %v327 = vadd.f32 0.0, %v326
  %v328 = vpop.f32.mrf.mxu0
  %329 = vmatprep.mubr.f32.mxu0 0.0
  %330 = vmatmul.mubr.f32.gmra.mxu0 %v252
  %v331 = vpop.f32.mrf.mxu0
  %v332 = vadd.f32 0.0, %v331
  %v333 = vpop.f32.mrf.mxu0
  %334 = vmatprep.mubr.f32.mxu0 0.0
  %335 = vmatmul.mubr.f32.gmra.mxu0 %v255
  %v336 = vpop.f32.mrf.mxu0
  %v337 = vadd.f32 0.0, %v336
  %v338 = vpop.f32.mrf.mxu0
  %339 = vmatprep.mubr.f32.mxu0 0.0
  %340 = vmatmul.mubr.f32.gmra.mxu0 %v258
  %v341 = vpop.f32.mrf.mxu0
  %v342 = vadd.f32 0.0, %v341
  %v343 = vpop.f32.mrf.mxu0
  %344 = vdwg.mxu0
  %v346 = vsel %vm247, %v45, 0
  %v349 = vsel %vm247, %v46, 0
  %v352 = vsel %vm247, %v47, 0
  %v355 = vsel %vm247, %v48, 0
  %357 = vmatprep.subr.mxu0 0.0
  %358 = vmatpush1.msra.mxu0 0.0
  %359 = vmatprep.subr.mxu0 0.0
  %360 = vmatpush1.msra.mxu0 0.0
  %361 = vmatprep.subr.mxu0 0.0
  %362 = vmatpush1.msra.mxu0 0.0
  %363 = vmatprep.subr.mxu0 0.0
  %364 = vmatpush1.msra.mxu0 0.0
  %365 = vmatprep.subr.mxu0 0.0
  %366 = vmatpush1.msra.mxu0 0.0
  %367 = vmatprep.subr.mxu0 0.0
  %368 = vmatpush1.msra.mxu0 0.0
  %369 = vmatprep.subr.mxu0 0.0
  %370 = vmatpush1.msra.mxu0 0.0
  %371 = vmatprep.subr.mxu0 0.0
  %372 = vmatpush1.msra.mxu0 0.0
  %373 = vmatprep.subr.mxu0 0.0
  %374 = vmatpush1.msra.mxu0 0.0
  %375 = vmatprep.subr.mxu0 0.0
  %376 = vmatpush1.msra.mxu0 0.0
  %377 = vmatprep.subr.mxu0 0.0
  %378 = vmatpush1.msra.mxu0 0.0
  %379 = vmatprep.subr.mxu0 0.0
  %380 = vmatpush1.msra.mxu0 0.0
  %381 = vmatprep.subr.mxu0 0.0
  %382 = vmatpush1.msra.mxu0 0.0
  %383 = vmatprep.subr.mxu0 0.0
  %384 = vmatpush1.msra.mxu0 0.0
  %385 = vmatprep.subr.mxu0 0.0
  %386 = vmatpush1.msra.mxu0 0.0
  %387 = vmatprep.subr.mxu0 0.0
  %388 = vmatpush1.msra.mxu0 %v244
  %389 = vmatprep.subr.mxu0 0.0
  %390 = vmatpush2.msra.mxu0 0.0
  %391 = vmatprep.subr.mxu0 0.0
  %392 = vmatpush2.msra.mxu0 0.0
  %393 = vmatprep.subr.mxu0 0.0
  %394 = vmatpush2.msra.mxu0 0.0
  %395 = vmatprep.subr.mxu0 0.0
  %396 = vmatpush2.msra.mxu0 0.0
  %397 = vmatprep.subr.mxu0 0.0
  %398 = vmatpush2.msra.mxu0 0.0
  %399 = vmatprep.subr.mxu0 0.0
  %400 = vmatpush2.msra.mxu0 0.0
  %401 = vmatprep.subr.mxu0 0.0
  %402 = vmatpush2.msra.mxu0 0.0
  %403 = vmatprep.subr.mxu0 0.0
  %404 = vmatpush2.msra.mxu0 0.0
  %405 = vmatprep.subr.mxu0 0.0
  %406 = vmatpush2.msra.mxu0 0.0
  %407 = vmatprep.subr.mxu0 0.0
  %408 = vmatpush2.msra.mxu0 0.0
  %409 = vmatprep.subr.mxu0 0.0
  %410 = vmatpush2.msra.mxu0 0.0
  %411 = vmatprep.subr.mxu0 0.0
  %412 = vmatpush2.msra.mxu0 0.0
  %413 = vmatprep.subr.mxu0 0.0
  %414 = vmatpush2.msra.mxu0 0.0
  %415 = vmatprep.subr.mxu0 0.0
  %416 = vmatpush2.msra.mxu0 0.0
  %417 = vmatprep.subr.mxu0 0.0
  %418 = vmatpush2.msra.mxu0 0.0
  %419 = vmatprep.subr.mxu0 0.0
  %420 = vmatpush2.msra.mxu0 0.0
  %421 = vmatprep.mubr.f32.mxu0 0.0
  %422 = vmatmul.mubr.f32.gmra.mxu0 %v346
  %v423 = vpop.f32.mrf.mxu0
  %v424 = vadd.f32 %v327, %v423
  %v425 = vpop.f32.mrf.mxu0
  %426 = vmatprep.mubr.f32.mxu0 0.0
  %427 = vmatmul.mubr.f32.gmra.mxu0 %v349
  %v428 = vpop.f32.mrf.mxu0
  %v429 = vadd.f32 %v332, %v428
  %v430 = vpop.f32.mrf.mxu0
  %431 = vmatprep.mubr.f32.mxu0 0.0
  %432 = vmatmul.mubr.f32.gmra.mxu0 %v352
  %v433 = vpop.f32.mrf.mxu0
  %v434 = vadd.f32 %v337, %v433
  %v435 = vpop.f32.mrf.mxu0
  %436 = vmatprep.mubr.f32.mxu0 0.0
  %437 = vmatmul.mubr.f32.gmra.mxu0 %v355
  %v438 = vpop.f32.mrf.mxu0
  %v439 = vadd.f32 %v342, %v438
  %v440 = vpop.f32.mrf.mxu0
  %441 = vdwg.mxu0
  %s442 = scalar_lea.vmem %s3, 16
  %v443 = vld [vmem:[%s442] sm:$0xff]
  %v445 = vsel %vm247, %v240, 0
  %v448 = vsel %vm247, %v241, 0
  %v451 = vsel %vm247, %v242, 0
  %v454 = vsel %vm247, %v243, 0
  %456 = vmatprep.subr.mxu0 0.0
  %457 = vmatpush1.msra.mxu0 0.0
  %458 = vmatprep.subr.mxu0 0.0
  %459 = vmatpush1.msra.mxu0 0.0
  %460 = vmatprep.subr.mxu0 0.0
  %461 = vmatpush1.msra.mxu0 0.0
  %462 = vmatprep.subr.mxu0 0.0
  %463 = vmatpush1.msra.mxu0 0.0
  %464 = vmatprep.subr.mxu0 0.0
  %465 = vmatpush1.msra.mxu0 0.0
  %466 = vmatprep.subr.mxu0 0.0
  %467 = vmatpush1.msra.mxu0 0.0
  %468 = vmatprep.subr.mxu0 0.0
  %469 = vmatpush1.msra.mxu0 0.0
  %470 = vmatprep.subr.mxu0 0.0
  %471 = vmatpush1.msra.mxu0 0.0
  %472 = vmatprep.subr.mxu0 0.0
  %473 = vmatpush1.msra.mxu0 0.0
  %474 = vmatprep.subr.mxu0 0.0
  %475 = vmatpush1.msra.mxu0 0.0
  %476 = vmatprep.subr.mxu0 0.0
  %477 = vmatpush1.msra.mxu0 0.0
  %478 = vmatprep.subr.mxu0 0.0
  %479 = vmatpush1.msra.mxu0 0.0
  %480 = vmatprep.subr.mxu0 0.0
  %481 = vmatpush1.msra.mxu0 0.0
  %482 = vmatprep.subr.mxu0 0.0
  %483 = vmatpush1.msra.mxu0 0.0
  %484 = vmatprep.subr.mxu0 0.0
  %485 = vmatpush1.msra.mxu0 0.0
  %486 = vmatprep.subr.mxu0 0.0
  %487 = vmatpush1.msra.mxu0 %v443
  %488 = vmatprep.subr.mxu0 0.0
  %489 = vmatpush2.msra.mxu0 0.0
  %490 = vmatprep.subr.mxu0 0.0
  %491 = vmatpush2.msra.mxu0 0.0
  %492 = vmatprep.subr.mxu0 0.0
  %493 = vmatpush2.msra.mxu0 0.0
  %494 = vmatprep.subr.mxu0 0.0
  %495 = vmatpush2.msra.mxu0 0.0
  %496 = vmatprep.subr.mxu0 0.0
  %497 = vmatpush2.msra.mxu0 0.0
  %498 = vmatprep.subr.mxu0 0.0
  %499 = vmatpush2.msra.mxu0 0.0
  %500 = vmatprep.subr.mxu0 0.0
  %501 = vmatpush2.msra.mxu0 0.0
  %502 = vmatprep.subr.mxu0 0.0
  %503 = vmatpush2.msra.mxu0 0.0
  %504 = vmatprep.subr.mxu0 0.0
  %505 = vmatpush2.msra.mxu0 0.0
  %506 = vmatprep.subr.mxu0 0.0
  %507 = vmatpush2.msra.mxu0 0.0
  %508 = vmatprep.subr.mxu0 0.0
  %509 = vmatpush2.msra.mxu0 0.0
  %510 = vmatprep.subr.mxu0 0.0
  %511 = vmatpush2.msra.mxu0 0.0
  %512 = vmatprep.subr.mxu0 0.0
  %513 = vmatpush2.msra.mxu0 0.0
  %514 = vmatprep.subr.mxu0 0.0
  %515 = vmatpush2.msra.mxu0 0.0
  %516 = vmatprep.subr.mxu0 0.0
  %517 = vmatpush2.msra.mxu0 0.0
  %518 = vmatprep.subr.mxu0 0.0
  %519 = vmatpush2.msra.mxu0 0.0
  %520 = vmatprep.mubr.f32.mxu0 0.0
  %521 = vmatmul.mubr.f32.gmra.mxu0 %v445
  %v522 = vpop.f32.mrf.mxu0
  %v523 = vadd.f32 0.0, %v522
  %v524 = vpop.f32.mrf.mxu0
  %525 = vmatprep.mubr.f32.mxu0 0.0
  %526 = vmatmul.mubr.f32.gmra.mxu0 %v448
  %v527 = vpop.f32.mrf.mxu0
  %v528 = vadd.f32 0.0, %v527
  %v529 = vpop.f32.mrf.mxu0
  %530 = vmatprep.mubr.f32.mxu0 0.0
  %531 = vmatmul.mubr.f32.gmra.mxu0 %v451
  %v532 = vpop.f32.mrf.mxu0
  %v533 = vadd.f32 0.0, %v532
  %v534 = vpop.f32.mrf.mxu0
  %535 = vmatprep.mubr.f32.mxu0 0.0
  %536 = vmatmul.mubr.f32.gmra.mxu0 %v454
  %v537 = vpop.f32.mrf.mxu0
  %v538 = vadd.f32 0.0, %v537
  %v539 = vpop.f32.mrf.mxu0
  %540 = vdwg.mxu0
  %v541 = vadd.f32 %v424, %v523
  %v542 = vadd.f32 %v429, %v528
  %v543 = vadd.f32 %v434, %v533
  %v544 = vadd.f32 %v439, %v538
  %v545 = vld [vmem:[%s4] sm:$0x1]
  %v547 = vlaneseq
  %v548 = vshrl.u32 %v547, 7
  %v549 = vsub.s32 0, %v548
  %v550 = vrot.slane %v545, %v549
  %v552 = vadd.f32 %v541, %v550
  %v553 = vadd.f32 %v542, %v550
  %v554 = vadd.f32 %v543, %v550
  %v555 = vadd.f32 %v544, %v550
  %556 = vst.msk [vmem:[%s5] sm:$0xff] %vm247, %v552
  %557 = vst.msk [vmem:[%s5 + $0x8] sm:$0xff] %vm247, %v553
  %558 = vst.msk [vmem:[%s5 + $0x10] sm:$0xff] %vm247, %v554
  %559 = vst.msk [vmem:[%s5 + $0x18] sm:$0xff] %vm247, %v555
  // Predicated region
  $region22: #{diffusion_graph_conv.1} parent=0 // pred_check
    _
  $region23: #{diffusion_graph_conv.1} parent=0 // pred_check_branch
    %561 = sbr.rel (0) target = $region25
  $region24: #{diffusion_graph_conv.1} parent=0 // pred_region
    _
  $region25: #{diffusion_graph_conv.1} parent=0 // pred_fallthru
    _
  // Predicated region
  $region26: #{diffusion_graph_conv.1} parent=0 // pred_check
    _
  $region27: #{diffusion_graph_conv.1} parent=0 // pred_check_branch
    %563 = sbr.rel (0) target = $region29
  $region28: #{diffusion_graph_conv.1} parent=0 // pred_region
    _
  $region29: #{diffusion_graph_conv.1} parent=0 // pred_fallthru
    _

</llo_original>
